<compile_context>
chip_gen: v7x
topology: tpu7x:2x2x1
jax: 0.10.0
libtpu: 0.0.40
codegen_flags: <defaults>
</compile_context>

<pallas_src>
import functools

import jax
import jax.numpy as jnp
from jax.experimental import pallas as pl
from jax.experimental.pallas import tpu as pltpu


def _ln_kernel(x_ref, wb_ref, o_ref, *, eps, inv_r):
    """x_ref/o_ref: (Bt, R, Wt) block, reduce over rows (axis=1).

    wb_ref: (2, R, 1) f32 -- packed per-row weight (index 0) and bias (index 1).
    """
    x = x_ref[...].astype(jnp.float32)                       # (Bt, R, Wt)
    mu = jnp.sum(x, axis=1, keepdims=True) * inv_r           # (Bt, 1, Wt)
    d = x - mu
    var = jnp.sum(d * d, axis=1, keepdims=True) * inv_r      # two-pass variance
    inv_sig = jax.lax.rsqrt(var + eps)                       # EUP, per column
    wb = wb_ref[...]                                         # (2, R, 1) f32
    w = wb[0:1]                                              # (1, R, 1)
    b = wb[1:2]                                              # (1, R, 1)
    o_ref[...] = (d * inv_sig * w + b).astype(o_ref.dtype)


# Raw x block budget (bytes).  ~2 MiB is at/near HBM roofline on v5e/v6e and
# keeps the double-buffered in+out footprint plus f32 temps comfortably under
# the explicit VMEM limit below on every generation, including v7x (64 MiB).
_BLOCK_BUDGET_BYTES = 2 * 1024 * 1024
_VMEM_LIMIT_BYTES = 48 * 1024 * 1024


def _largest_divisor_leq(n, cap):
    cap = max(1, min(n, cap))
    for d in range(cap, 0, -1):
        if n % d == 0:
            return d
    return 1


def _pick_tiles(B, R, W, itemsize):
    """Choose (Bt, Wt) so the raw block ~= budget and the grid has >=2 steps."""
    budget = _BLOCK_BUDGET_BYTES
    if W >= 128:
        # Lane tile: multiple of 128 (unmasked or 128-aligned masked stores).
        lane_cap = max(128, (budget // max(1, R * itemsize)) // 128 * 128)
        Wt = min(lane_cap, (W // 128) * 128)
    else:
        # Small width: take the full (lane-sparse) width; tensors here are tiny.
        Wt = W
    # Fill the remaining budget with batch (exact divisor -> no batch masking).
    Bt = _largest_divisor_leq(B, max(1, budget // max(1, R * Wt * itemsize)))
    # Guarantee >= 2 grid steps when possible (v7x megacore + pipelining).
    steps = pl.cdiv(B, Bt) * pl.cdiv(W, Wt)
    if steps < 2:
        if B >= 2:
            Bt = _largest_divisor_leq(B, (B + 1) // 2)
        elif Wt >= 256:
            Wt = max(128, (Wt // 2) // 128 * 128)
    return Bt, Wt


def layer_norm(x, weight, bias, eps=1e-5):
    """Pallas TPU LayerNorm over axes (1, 2) of an NCHW tensor.

    x: (B, C, H, W);  weight, bias: (C,)  (per-channel affine).
    """
    B, C, H, W = x.shape
    R = C * H
    itemsize = jnp.dtype(x.dtype).itemsize

    x3 = x.reshape(B, R, W)                                  # free reshape
    # Per-row (c, h) affine params packed together: row index = c*H + h.
    wb = jnp.stack([jnp.repeat(weight.astype(jnp.float32), H),
                    jnp.repeat(bias.astype(jnp.float32), H)]).reshape(2, R, 1)

    Bt, Wt = _pick_tiles(B, R, W, itemsize)
    grid = (pl.cdiv(B, Bt), pl.cdiv(W, Wt))
    kernel = functools.partial(_ln_kernel, eps=float(eps), inv_r=1.0 / R)

    cost = pl.CostEstimate(
        flops=7 * x.size,                    # ~7 VPU ops / element
        transcendentals=B * W,               # one rsqrt per (batch, width) col
        bytes_accessed=2 * x.size * itemsize + 2 * R * 4,
    )

    out3 = pl.pallas_call(
        kernel,
        out_shape=jax.ShapeDtypeStruct((B, R, W), x.dtype),
        grid_spec=pltpu.PrefetchScalarGridSpec(
            num_scalar_prefetch=0,
            grid=grid,
            in_specs=[
                pl.BlockSpec((Bt, R, Wt), lambda b, j: (b, 0, j)),
                pl.BlockSpec((2, R, 1), lambda b, j: (0, 0, 0)),  # loaded once
            ],
            out_specs=pl.BlockSpec((Bt, R, Wt), lambda b, j: (b, 0, j)),
        ),
        compiler_params=pltpu.CompilerParams(
            dimension_semantics=("parallel", "parallel"),
            vmem_limit_bytes=_VMEM_LIMIT_BYTES,
        ),
        cost_estimate=cost,
    )(x3, wb)
    return out3.reshape(B, C, H, W)


def _layer_norm_ref(x, weight, bias, eps=1e-5):
    xf = x.astype(jnp.float32)
    mu = jnp.mean(xf, axis=(1, 2), keepdims=True)
    sig = jnp.sqrt(jnp.mean((xf - mu) ** 2, axis=(1, 2), keepdims=True) + eps)
    return ((xf - mu) / sig * weight[None, :, None, None]
            + bias[None, :, None, None]).astype(x.dtype)


if __name__ == "__main__":
    key = jax.random.PRNGKey(0)
    k1, k2, k3 = jax.random.split(key, 3)

    # Case 1: small W (16) -> full-width lane tile. Params = reset_parameters().
    B, C, H, W = 2, 4, 16, 16
    x = jax.random.normal(k1, (B, C, H, W), dtype=jnp.float32)
    weight = jnp.ones((C,), dtype=jnp.float32)
    bias = jnp.zeros((C,), dtype=jnp.float32)
    out = jax.block_until_ready(layer_norm(x, weight, bias, eps=1e-5))
    ref = _layer_norm_ref(x, weight, bias, eps=1e-5)
    assert out.shape == (B, C, H, W)
    assert jnp.allclose(out, ref, atol=1e-4, rtol=1e-4), \
        float(jnp.max(jnp.abs(out - ref)))

    # Case 2: lane-dense W (multiple of 128), non-trivial affine params.
    B2, C2, H2, W2 = 2, 4, 8, 128
    x2 = jax.random.normal(k2, (B2, C2, H2, W2), dtype=jnp.float32)
    w2 = jax.random.normal(jax.random.PRNGKey(1), (C2,), dtype=jnp.float32)
    b2 = jax.random.normal(jax.random.PRNGKey(2), (C2,), dtype=jnp.float32)
    out2 = jax.block_until_ready(layer_norm(x2, w2, b2, eps=1e-5))
    ref2 = _layer_norm_ref(x2, w2, b2, eps=1e-5)
    assert out2.shape == (B2, C2, H2, W2)
    assert jnp.allclose(out2, ref2, atol=1e-4, rtol=1e-4), \
        float(jnp.max(jnp.abs(out2 - ref2)))

    # Case 3: W >= 128 but NOT a multiple of 128 -> masked boundary lane tile.
    B3, C3, H3, W3 = 2, 4, 8, 160
    x3 = jax.random.normal(k3, (B3, C3, H3, W3), dtype=jnp.float32)
    w3 = jax.random.normal(jax.random.PRNGKey(3), (C3,), dtype=jnp.float32)
    b3 = jax.random.normal(jax.random.PRNGKey(4), (C3,), dtype=jnp.float32)
    out3 = jax.block_until_ready(layer_norm(x3, w3, b3, eps=1e-5))
    ref3 = _layer_norm_ref(x3, w3, b3, eps=1e-5)
    assert out3.shape == (B3, C3, H3, W3)
    assert jnp.allclose(out3, ref3, atol=1e-4, rtol=1e-4), \
        float(jnp.max(jnp.abs(out3 - ref3)))

    print("KERNEL_OK")
</pallas_src>

<mosaic_0001>
module attributes {stable_mosaic.version = 11 : i64} {
  func.func @_ln_kernel(%arg0: i32, %arg1: i32, %arg2: memref<1x64x16xf32, #tpu.memory_space<vmem>>, %arg3: memref<2x64x1xf32, #tpu.memory_space<vmem>>, %arg4: memref<1x64x16xf32, #tpu.memory_space<vmem>>) attributes {dimension_semantics = [#tpu.dimension_semantics<parallel>, #tpu.dimension_semantics<parallel>], iteration_bounds = array<i64: 2, 1>, scalar_prefetch = 0 : i64, scratch_operands = 0 : i64, tpu.core_type = #tpu.core_type<tc>, window_params = [{transform_indices = @transform_0, window_bounds = array<i64: 1, 64, 16>}, {pipeline_mode = #tpu.pipeline_mode<synchronous>, transform_indices = @transform_1, window_bounds = array<i64: 2, 64, 1>}, {transform_indices = @transform_2, window_bounds = array<i64: 1, 64, 16>}]} {
    %c0 = arith.constant 0 : index
    %c0_0 = arith.constant 0 : index
    %c0_1 = arith.constant 0 : index
    %0 = vector.load %arg2[%c0, %c0_0, %c0_1] : memref<1x64x16xf32, #tpu.memory_space<vmem>>, vector<1x64x16xf32>
    %cst = arith.constant dense<0.000000e+00> : vector<1x16xf32>
    %1 = vector.multi_reduction <add>, %0, %cst [1] : vector<1x64x16xf32> to vector<1x16xf32>
    %2 = vector.shape_cast %1 : vector<1x16xf32> to vector<1x1x16xf32>
    %cst_2 = arith.constant 1.562500e-02 : f32
    %3 = vector.broadcast %cst_2 : f32 to vector<1x1x16xf32>
    %4 = arith.mulf %2, %3 : vector<1x1x16xf32>
    %5 = vector.broadcast %4 : vector<1x1x16xf32> to vector<1x64x16xf32>
    %6 = arith.subf %0, %5 : vector<1x64x16xf32>
    %7 = arith.mulf %6, %6 : vector<1x64x16xf32>
    %cst_3 = arith.constant dense<0.000000e+00> : vector<1x16xf32>
    %8 = vector.multi_reduction <add>, %7, %cst_3 [1] : vector<1x64x16xf32> to vector<1x16xf32>
    %9 = vector.shape_cast %8 : vector<1x16xf32> to vector<1x1x16xf32>
    %cst_4 = arith.constant 1.562500e-02 : f32
    %10 = vector.broadcast %cst_4 : f32 to vector<1x1x16xf32>
    %11 = arith.mulf %9, %10 : vector<1x1x16xf32>
    %cst_5 = arith.constant 9.99999974E-6 : f32
    %12 = vector.broadcast %cst_5 : f32 to vector<1x1x16xf32>
    %13 = arith.addf %11, %12 : vector<1x1x16xf32>
    %14 = math.rsqrt %13 : vector<1x1x16xf32>
    %c0_6 = arith.constant 0 : index
    %c0_7 = arith.constant 0 : index
    %c0_8 = arith.constant 0 : index
    %15 = vector.load %arg3[%c0_6, %c0_7, %c0_8] : memref<2x64x1xf32, #tpu.memory_space<vmem>>, vector<2x64x1xf32>
    %16 = vector.extract_strided_slice %15 {offsets = [0, 0, 0], sizes = [1, 64, 1], strides = [1, 1, 1]} : vector<2x64x1xf32> to vector<1x64x1xf32>
    %17 = vector.extract_strided_slice %15 {offsets = [1, 0, 0], sizes = [1, 64, 1], strides = [1, 1, 1]} : vector<2x64x1xf32> to vector<1x64x1xf32>
    %18 = vector.broadcast %14 : vector<1x1x16xf32> to vector<1x64x16xf32>
    %19 = arith.mulf %6, %18 : vector<1x64x16xf32>
    %20 = vector.broadcast %16 : vector<1x64x1xf32> to vector<1x64x16xf32>
    %21 = arith.mulf %19, %20 : vector<1x64x16xf32>
    %22 = vector.broadcast %17 : vector<1x64x1xf32> to vector<1x64x16xf32>
    %23 = arith.addf %21, %22 : vector<1x64x16xf32>
    %c0_9 = arith.constant 0 : index
    %c0_10 = arith.constant 0 : index
    %c0_11 = arith.constant 0 : index
    %24 = vector.load %arg4[%c0_9, %c0_10, %c0_11] : memref<1x64x16xf32, #tpu.memory_space<vmem>>, vector<1x64x16xf32>
    tpu.vector_store %arg4[%c0_9, %c0_10, %c0_11], %23 {strides = array<i32>} : memref<1x64x16xf32, #tpu.memory_space<vmem>>, vector<1x64x16xf32>,
    return
  }
  func.func @transform_0(%arg0: i32, %arg1: i32) -> (i32, i32, i32) {
    %c0_i32 = arith.constant 0 : i32
    %c0_i32_0 = arith.constant 0 : i32
    return %arg0, %c0_i32, %arg1 : i32, i32, i32
  }
  func.func @transform_1(%arg0: i32, %arg1: i32) -> (i32, i32, i32) {
    %c0_i32 = arith.constant 0 : i32
    %c0_i32_0 = arith.constant 0 : i32
    %c0_i32_1 = arith.constant 0 : i32
    %c0_i32_2 = arith.constant 0 : i32
    return %c0_i32, %c0_i32_0, %c0_i32_1 : i32, i32, i32
  }
  func.func @transform_2(%arg0: i32, %arg1: i32) -> (i32, i32, i32) {
    %c0_i32 = arith.constant 0 : i32
    %c0_i32_0 = arith.constant 0 : i32
    return %arg0, %c0_i32, %arg1 : i32, i32, i32
  }
}

</mosaic_0001>

<llo_original>
// kernel: tpu_custom_call.1
$region0: #{tpu_custom_call.1}
  #allocation0 [shape = 'u32[]', space=smem, size = 0x4, offset = 0x4, fixed_abs, tag = 'smem constant byte address 0x4 - core index']
  #allocation1 [shape = 'u32[144,128]{1,0:T(1,128)}', space=vmem, size = 0x12000, scoped, tag = 'internal scratch']
  %s0 = inlined_call_operand.vmem [shape: f32[2,64,16], index: 0, kind: input, shape index: {}]
  %s1 = inlined_call_operand.vmem [shape: f32[2,64,1], index: 1, kind: input, shape index: {}]
  %s2 = inlined_call_operand.vmem [shape: f32[2,64,16], index: 2, kind: output, shape index: {}]
  %s3 = sld [smem:[#allocation0]]
  $region41: #{tpu_custom_call.1} parent=0
    _
  %s5 = ssub.s32 1, %s3
  %s6 = scalar_select 0, %s5, %s3
  loop: start=0, step=1, limit=4
  $region2: #{tpu_custom_call.1} parent=0 // loop_pre_header
    _
  $region3: #{tpu_custom_call.1} parent=0 // loop_header
    %s8 = sphi 0, %s12
    %p9 = scmp.ge.s32.totalorder %s8, 4
    %s15 = sphi 0, %s27
    %s16 = sphi 0, %s23
    %s17 = sphi 0, %s15
    %s18 = sphi 0, %s16
    %s19 = sphi 0, %s17
    %s20 = sphi 0, %s18
    %s32 = sphi 0, %s34
    %s35 = sphi 0, %s32
    %s36 = sphi 0, %s35
    %s52 = sphi 0, %s36
    %s56 = sphi 0, %s56
    %s58 = sphi 0, %s56
    %s59 = sphi 0, %s58
    %s73 = sphi 0, %s59
    %s81 = sphi 0, %s83
    %s84 = sphi 0, %s81
    %s85 = sphi 0, %s84
    %s101 = sphi 0, %s85
  $region4: #{tpu_custom_call.1} parent=0 // loop_header_branch
    %11 = sbr.rel (%p9) target = $region8
  $region5: #{tpu_custom_call.1} parent=0 // loop_body
    %s13 = ssub.s32 %s8, 1
    %s14 = ssub.s32 %s8, 2
    %s21 = sadd.s32 1, %s16
    %p22 = scmp.ge.s32.totalorder %s21, 1
    %s23 = scalar_select %p22, 0, %s21
    %s24 = sadd.s32 1, %s15
    %s25 = scalar_select %p22, %s24, %s15
    %p26 = scmp.ge.s32.totalorder %s25, 2
    %s27 = scalar_select %p26, 0, %s25
    %s28 = ssub.s32 %s15, %s27
    %s29 = ssub.s32 %s16, %s23
    %s30 = sor.u32 %s28, %s29
    %p31 = scmp.eq.s32.totalorder %s30, 0
    %s33 = sadd.s32 %s32, 1
    %s34 = scalar_select %p31, %s32, %s33
    %p37 = pneg %p31
    %p38 = scmp.eq.s32.totalorder %s8, 1
    %p39 = por %p37, %p38
    %p40 = scmp.ne.s32.totalorder %s32, %s35
    %p41 = scmp.eq.s32.totalorder %s8, 0
    %p42 = por %p40, %p41
    %p43 = scmp.ne.s32.totalorder %s32, %s35
    %p44 = scmp.eq.s32.totalorder %s13, 1
    %p45 = por %p43, %p44
    %p46 = scmp.ne.s32.totalorder %s35, %s36
    %p47 = scmp.eq.s32.totalorder %s13, 0
    %p48 = por %p46, %p47
    %p49 = scmp.ne.s32.totalorder %s35, %s36
    %p50 = scmp.eq.s32.totalorder %s14, 1
    %p51 = por %p49, %p50
    %p53 = scmp.ne.s32.totalorder %s36, %s52
    %p54 = scmp.eq.s32.totalorder %s14, 0
    %p55 = por %p53, %p54
    %s57 = sadd.s32 %s56, 1
    %p60 = scmp.eq.s32.totalorder %s8, 1
    %p61 = scmp.ne.s32.totalorder %s56, %s58
    %p62 = scmp.eq.s32.totalorder %s8, 0
    %p63 = por %p61, %p62
    %p64 = scmp.ne.s32.totalorder %s56, %s58
    %p65 = scmp.eq.s32.totalorder %s13, 1
    %p66 = por %p64, %p65
    %p67 = scmp.ne.s32.totalorder %s58, %s59
    %p68 = scmp.eq.s32.totalorder %s13, 0
    %p69 = por %p67, %p68
    %p70 = scmp.ne.s32.totalorder %s58, %s59
    %p71 = scmp.eq.s32.totalorder %s14, 1
    %p72 = por %p70, %p71
    %p74 = scmp.ne.s32.totalorder %s59, %s73
    %p75 = scmp.eq.s32.totalorder %s14, 0
    %p76 = por %p74, %p75
    %s77 = ssub.s32 %s15, %s27
    %s78 = ssub.s32 %s16, %s23
    %s79 = sor.u32 %s77, %s78
    %p80 = scmp.eq.s32.totalorder %s79, 0
    %s82 = sadd.s32 %s81, 1
    %s83 = scalar_select %p80, %s81, %s82
    %p86 = pneg %p80
    %p87 = scmp.eq.s32.totalorder %s8, 1
    %p88 = por %p86, %p87
    %p89 = scmp.ne.s32.totalorder %s81, %s84
    %p90 = scmp.eq.s32.totalorder %s8, 0
    %p91 = por %p89, %p90
    %p92 = scmp.ne.s32.totalorder %s81, %s84
    %p93 = scmp.eq.s32.totalorder %s13, 1
    %p94 = por %p92, %p93
    %p95 = scmp.ne.s32.totalorder %s84, %s85
    %p96 = scmp.eq.s32.totalorder %s13, 0
    %p97 = por %p95, %p96
    %p98 = scmp.ne.s32.totalorder %s84, %s85
    %p99 = scmp.eq.s32.totalorder %s14, 1
    %p100 = por %p98, %p99
    %p102 = scmp.ne.s32.totalorder %s85, %s101
    %p103 = scmp.eq.s32.totalorder %s14, 0
    %p104 = por %p102, %p103
    %p105 = scmp.le.s32.totalorder 1, %s8
    %p106 = scmp.lt.s32.totalorder %s8, 3
    %p107 = pnand %p105, %p106
    %p108 = pneg %p107
    // Predicated region
    $region9: #{tpu_custom_call.1} parent=5 // pred_check
      _
    $region10: #{tpu_custom_call.1} parent=5 // pred_check_branch
      %110 = sbr.rel (%p107) target = $region12
    $region11: #{tpu_custom_call.1} parent=5 // pred_region
      %s111 = ssub.s32 %s8, 1
      // Predicated region
      $region13: #{tpu_custom_call.1} parent=11 // pred_check
        %p112 = pneg %p69
      $region14: #{tpu_custom_call.1} parent=11 // pred_check_branch
        %114 = sbr.rel (%p112) target = $region16
      $region15: #{tpu_custom_call.1} parent=11 // pred_region
        _
      $region16: #{tpu_custom_call.1} parent=11 // pred_fallthru
        _
    $region12: #{tpu_custom_call.1} parent=5 // pred_fallthru
      _
    %p115 = scmp.lt.s32.totalorder %s8, 2
    // Predicated region
    $region17: #{tpu_custom_call.1} parent=5 // pred_check
      %p116 = pneg %p115
    $region18: #{tpu_custom_call.1} parent=5 // pred_check_branch
      %118 = sbr.rel (%p116) target = $region20
    $region19: #{tpu_custom_call.1} parent=5 // pred_region
      // Predicated region
      $region21: #{tpu_custom_call.1} parent=19 // pred_check
        %p119 = pneg %p42
      $region22: #{tpu_custom_call.1} parent=19 // pred_check_branch
        %121 = sbr.rel (%p119) target = $region24
      $region23: #{tpu_custom_call.1} parent=19 // pred_region
        %p122 = scmp.lt.s32.totalorder %s15, 1
        %s123 = scalar_select %p122, %s15, 1
        %p124 = scmp.lt.s32.totalorder %s16, 0
        %s125 = scalar_select %p124, %s16, 0
        %s126 = smul.addr %s123, 8
        %s127 = sadd.s32 %s125, %s126
        %s128 = smul.addr %s127, 8
        %s129 = scalar_lea.vmem %s0, %s128
      $region24: #{tpu_custom_call.1} parent=19 // pred_fallthru
        _
    $region20: #{tpu_custom_call.1} parent=5 // pred_fallthru
      _
    %p130 = scmp.le.s32.totalorder 1, %s8
    %p131 = scmp.lt.s32.totalorder %s8, 3
    %p132 = pnand %p130, %p131
    %p133 = pneg %p132
    // Predicated region
    $region25: #{tpu_custom_call.1} parent=5 // pred_check
      _
    $region26: #{tpu_custom_call.1} parent=5 // pred_check_branch
      %135 = sbr.rel (%p132) target = $region28
    $region27: #{tpu_custom_call.1} parent=5 // pred_region
      %s136 = ssub.s32 %s8, 1
      %p137 = scmp.lt.s32.totalorder %s17, 1
      %s138 = scalar_select %p137, %s17, 1
      %p139 = scmp.lt.s32.totalorder %s18, 0
      %s140 = scalar_select %p139, %s18, 0
      %s141 = smul.addr %s138, 8
      %s142 = sadd.s32 %s140, %s141
      %s143 = smul.addr %s142, 8
      %s144 = scalar_lea.vmem %s0, %s143
      %p145 = pneg %p48
      %p146 = pneg %p45
      %p147 = pneg %p69
      %p148 = pneg %p66
      %p149 = pneg %p97
      %p150 = pneg %p94
      %p151 = scmp.lt.s32.totalorder %s17, 1
      %s152 = scalar_select %p151, %s17, 1
      %p153 = scmp.lt.s32.totalorder %s18, 0
      %s154 = scalar_select %p153, %s18, 0
      %s155 = smul.addr %s152, 8
      %s156 = sadd.s32 %s154, %s155
      %s157 = smul.addr %s156, 8
      %s158 = scalar_lea.vmem %s2, %s157
      %p159 = scmp.lt.s32.totalorder %s17, 1
      %s160 = scalar_select %p159, %s17, 1
      %p161 = scmp.lt.s32.totalorder %s18, 0
      %s162 = scalar_select %p161, %s18, 0
      %s163 = smul.addr %s160, 8
      %s164 = sadd.s32 %s162, %s163
      %s165 = smul.addr %s164, 8
      %s166 = scalar_lea.vmem %s0, %s165
      %p167 = scmp.lt.s32.totalorder %s17, 1
      %s168 = scalar_select %p167, %s17, 1
      %p169 = scmp.lt.s32.totalorder %s18, 0
      %s170 = scalar_select %p169, %s18, 0
      %s171 = smul.addr %s168, 8
      %s172 = sadd.s32 %s170, %s171
      %s173 = smul.addr %s172, 8
      %s174 = scalar_lea.vmem %s2, %s173
      %v175 = vld [vmem:[%s166] sm:$0xff]
      %v176 = vld [vmem:[%s166 + $0x8] sm:$0xff]
      %v177 = vld [vmem:[%s166 + $0x10] sm:$0xff]
      %v178 = vld [vmem:[%s166 + $0x18] sm:$0xff]
      %v179 = vld [vmem:[%s166 + $0x20] sm:$0xff]
      %v180 = vld [vmem:[%s166 + $0x28] sm:$0xff]
      %v181 = vld [vmem:[%s166 + $0x30] sm:$0xff]
      %v182 = vld [vmem:[%s166 + $0x38] sm:$0xff]
      %vm183 = vcmask 130048
      %v184 = vsel %vm183, %v175, 0.0
      %v185 = vsel %vm183, %v176, 0.0
      %v186 = vadd.f32 %v184, %v185
      %v187 = vsel %vm183, %v177, 0.0
      %v188 = vadd.f32 %v186, %v187
      %v189 = vsel %vm183, %v178, 0.0
      %v190 = vadd.f32 %v188, %v189
      %v191 = vsel %vm183, %v179, 0.0
      %v192 = vadd.f32 %v190, %v191
      %v193 = vsel %vm183, %v180, 0.0
      %v194 = vadd.f32 %v192, %v193
      %v195 = vsel %vm183, %v181, 0.0
      %v196 = vadd.f32 %v194, %v195
      %v197 = vsel %vm183, %v182, 0.0
      %v198 = vadd.f32 %v196, %v197
      %v199 = vrot.slane %v198, 4
      %v200 = vadd.f32 %v198, %v199
      %v201 = vrot.slane %v200, 2
      %v202 = vadd.f32 %v200, %v201
      %v203 = vrot.slane %v202, 1
      %v204 = vadd.f32 %v202, %v203
      %v205 = vmul.f32 %v204, 0.015625
      %v206 = vsub.f32 %v175, %v205
      %v207 = vsub.f32 %v176, %v205
      %v208 = vsub.f32 %v177, %v205
      %v209 = vsub.f32 %v178, %v205
      %v210 = vsub.f32 %v179, %v205
      %v211 = vsub.f32 %v180, %v205
      %v212 = vsub.f32 %v181, %v205
      %v213 = vsub.f32 %v182, %v205
      %v214 = vmul.f32 %v206, %v206
      %v215 = vmul.f32 %v207, %v207
      %v216 = vmul.f32 %v208, %v208
      %v217 = vmul.f32 %v209, %v209
      %v218 = vmul.f32 %v210, %v210
      %v219 = vmul.f32 %v211, %v211
      %v220 = vmul.f32 %v212, %v212
      %v221 = vmul.f32 %v213, %v213
      %v222 = vsel %vm183, %v214, 0.0
      %v223 = vsel %vm183, %v215, 0.0
      %v224 = vadd.f32 %v222, %v223
      %v225 = vsel %vm183, %v216, 0.0
      %v226 = vadd.f32 %v224, %v225
      %v227 = vsel %vm183, %v217, 0.0
      %v228 = vadd.f32 %v226, %v227
      %v229 = vsel %vm183, %v218, 0.0
      %v230 = vadd.f32 %v228, %v229
      %v231 = vsel %vm183, %v219, 0.0
      %v232 = vadd.f32 %v230, %v231
      %v233 = vsel %vm183, %v220, 0.0
      %v234 = vadd.f32 %v232, %v233
      %v235 = vsel %vm183, %v221, 0.0
      %v236 = vadd.f32 %v234, %v235
      %v237 = vrot.slane %v236, 4
      %v238 = vadd.f32 %v236, %v237
      %v239 = vrot.slane %v238, 2
      %v240 = vadd.f32 %v238, %v239
      %v241 = vrot.slane %v240, 1
      %v242 = vadd.f32 %v240, %v241
      %v243 = vmul.f32 %v242, 0.015625
      %v244 = vadd.f32 %v243, 1e-05
      %v245 = vrsqrt.pop %v244
      %v246 = vld [vmem:[%s1] sm:$0xff]
      %v247 = vld [vmem:[%s1 + $0x8] sm:$0xff]
      %v248 = vld [vmem:[%s1 + $0x10] sm:$0xff]
      %v249 = vld [vmem:[%s1 + $0x18] sm:$0xff]
      %v250 = vld [vmem:[%s1 + $0x20] sm:$0xff]
      %v251 = vld [vmem:[%s1 + $0x28] sm:$0xff]
      %v252 = vld [vmem:[%s1 + $0x30] sm:$0xff]
      %v253 = vld [vmem:[%s1 + $0x38] sm:$0xff]
      %v254 = vld [vmem:[%s1 + $0x40] sm:$0xff]
      %v255 = vld [vmem:[%s1 + $0x48] sm:$0xff]
      %v256 = vld [vmem:[%s1 + $0x50] sm:$0xff]
      %v257 = vld [vmem:[%s1 + $0x58] sm:$0xff]
      %v258 = vld [vmem:[%s1 + $0x60] sm:$0xff]
      %v259 = vld [vmem:[%s1 + $0x68] sm:$0xff]
      %v260 = vld [vmem:[%s1 + $0x70] sm:$0xff]
      %v261 = vld [vmem:[%s1 + $0x78] sm:$0xff]
      %v262 = vmul.f32 %v206, %v245
      %v263 = vmul.f32 %v207, %v245
      %v264 = vmul.f32 %v208, %v245
      %v265 = vmul.f32 %v209, %v245
      %v266 = vmul.f32 %v210, %v245
      %v267 = vmul.f32 %v211, %v245
      %v268 = vmul.f32 %v212, %v245
      %v269 = vmul.f32 %v213, %v245
      %271 = vset.pattern.permute.xlu0 0
      %272 = vperm.xlu0 %271, %v246
      %v273 = vpop.permute.xlu0 %272
      %276 = vset.pattern.permute.xlu0 0
      %277 = vperm.xlu0 %276, %v247
      %v278 = vpop.permute.xlu0 %277
      %281 = vset.pattern.permute.xlu0 0
      %282 = vperm.xlu0 %281, %v248
      %v283 = vpop.permute.xlu0 %282
      %286 = vset.pattern.permute.xlu0 0
      %287 = vperm.xlu0 %286, %v249
      %v288 = vpop.permute.xlu0 %287
      %291 = vset.pattern.permute.xlu0 0
      %292 = vperm.xlu0 %291, %v250
      %v293 = vpop.permute.xlu0 %292
      %296 = vset.pattern.permute.xlu0 0
      %297 = vperm.xlu0 %296, %v251
      %v298 = vpop.permute.xlu0 %297
      %301 = vset.pattern.permute.xlu0 0
      %302 = vperm.xlu0 %301, %v252
      %v303 = vpop.permute.xlu0 %302
      %306 = vset.pattern.permute.xlu0 0
      %307 = vperm.xlu0 %306, %v253
      %v308 = vpop.permute.xlu0 %307
      %v310 = vmul.f32 %v262, %v273
      %v311 = vmul.f32 %v263, %v278
      %v312 = vmul.f32 %v264, %v283
      %v313 = vmul.f32 %v265, %v288
      %v314 = vmul.f32 %v266, %v293
      %v315 = vmul.f32 %v267, %v298
      %v316 = vmul.f32 %v268, %v303
      %v317 = vmul.f32 %v269, %v308
      %319 = vset.pattern.permute.xlu0 0
      %320 = vperm.xlu0 %319, %v254
      %v321 = vpop.permute.xlu0 %320
      %324 = vset.pattern.permute.xlu0 0
      %325 = vperm.xlu0 %324, %v255
      %v326 = vpop.permute.xlu0 %325
      %329 = vset.pattern.permute.xlu0 0
      %330 = vperm.xlu0 %329, %v256
      %v331 = vpop.permute.xlu0 %330
      %334 = vset.pattern.permute.xlu0 0
      %335 = vperm.xlu0 %334, %v257
      %v336 = vpop.permute.xlu0 %335
      %339 = vset.pattern.permute.xlu0 0
      %340 = vperm.xlu0 %339, %v258
      %v341 = vpop.permute.xlu0 %340
      %344 = vset.pattern.permute.xlu0 0
      %345 = vperm.xlu0 %344, %v259
      %v346 = vpop.permute.xlu0 %345
      %349 = vset.pattern.permute.xlu0 0
      %350 = vperm.xlu0 %349, %v260
      %v351 = vpop.permute.xlu0 %350
      %354 = vset.pattern.permute.xlu0 0
      %355 = vperm.xlu0 %354, %v261
      %v356 = vpop.permute.xlu0 %355
      %v358 = vadd.f32 %v310, %v321
      %v359 = vadd.f32 %v311, %v326
      %v360 = vadd.f32 %v312, %v331
      %v361 = vadd.f32 %v313, %v336
      %v362 = vadd.f32 %v314, %v341
      %v363 = vadd.f32 %v315, %v346
      %v364 = vadd.f32 %v316, %v351
      %v365 = vadd.f32 %v317, %v356
      %366 = vst.msk [vmem:[%s174] sm:$0xff] %vm183, %v358
      %367 = vst.msk [vmem:[%s174 + $0x8] sm:$0xff] %vm183, %v359
      %368 = vst.msk [vmem:[%s174 + $0x10] sm:$0xff] %vm183, %v360
      %369 = vst.msk [vmem:[%s174 + $0x18] sm:$0xff] %vm183, %v361
      %370 = vst.msk [vmem:[%s174 + $0x20] sm:$0xff] %vm183, %v362
      %371 = vst.msk [vmem:[%s174 + $0x28] sm:$0xff] %vm183, %v363
      %372 = vst.msk [vmem:[%s174 + $0x30] sm:$0xff] %vm183, %v364
      %373 = vst.msk [vmem:[%s174 + $0x38] sm:$0xff] %vm183, %v365
      %p374 = scmp.lt.s32.totalorder %s17, 1
      %s375 = scalar_select %p374, %s17, 1
      %p376 = scmp.lt.s32.totalorder %s18, 0
      %s377 = scalar_select %p376, %s18, 0
      %s378 = smul.addr %s375, 8
      %s379 = sadd.s32 %s377, %s378
      %s380 = smul.addr %s379, 8
      %s381 = scalar_lea.vmem %s2, %s380
      // Predicated region
      $region29: #{tpu_custom_call.1} parent=27 // pred_check
        %p382 = pneg %p94
      $region30: #{tpu_custom_call.1} parent=27 // pred_check_branch
        %384 = sbr.rel (%p382) target = $region32
      $region31: #{tpu_custom_call.1} parent=27 // pred_region
        _
      $region32: #{tpu_custom_call.1} parent=27 // pred_fallthru
        _
    $region28: #{tpu_custom_call.1} parent=5 // pred_fallthru
      _
    %p385 = scmp.le.s32.totalorder 2, %s8
    // Predicated region
    $region33: #{tpu_custom_call.1} parent=5 // pred_check
      %p386 = pneg %p385
    $region34: #{tpu_custom_call.1} parent=5 // pred_check_branch
      %388 = sbr.rel (%p386) target = $region36
    $region35: #{tpu_custom_call.1} parent=5 // pred_region
      %s389 = ssub.s32 %s8, 2
      // Predicated region
      $region37: #{tpu_custom_call.1} parent=35 // pred_check
        %p390 = pneg %p100
      $region38: #{tpu_custom_call.1} parent=35 // pred_check_branch
        %392 = sbr.rel (%p390) target = $region40
      $region39: #{tpu_custom_call.1} parent=35 // pred_region
        %p393 = scmp.lt.s32.totalorder %s19, 1
        %s394 = scalar_select %p393, %s19, 1
        %p395 = scmp.lt.s32.totalorder %s20, 0
        %s396 = scalar_select %p395, %s20, 0
        %s397 = smul.addr %s394, 8
        %s398 = sadd.s32 %s396, %s397
        %s399 = smul.addr %s398, 8
        %s400 = scalar_lea.vmem %s2, %s399
      $region40: #{tpu_custom_call.1} parent=35 // pred_fallthru
        _
    $region36: #{tpu_custom_call.1} parent=5 // pred_fallthru
      _
  $region6: #{tpu_custom_call.1} parent=0 // loop_footer
    %s12 = sadd.s32 1, %s8
  $region7: #{tpu_custom_call.1} parent=0 // loop_footer_branch
    %7 = sbr.rel target = $region3
  $region8: #{tpu_custom_call.1} parent=0 // loop_exit
    _

</llo_original>
